<compile_context>
chip_gen: v7x
topology: tpu7x:2x2x1
jax: 0.10.0
libtpu: 0.0.40
codegen_flags: <defaults>
</compile_context>

<pallas_src>
import jax
import jax.numpy as jnp
from jax import lax
from jax.experimental import pallas as pl
from jax.experimental.pallas import tpu as pltpu

# Coefficients from the module __init__ (deterministic, in-script).
COEFFICIENTS = [0.5, 1.2, -0.7, 0.3, 0.9, -1.1, 0.8, 0.6, -0.2, 0.4]


def _round_up(x, m):
    return (x + m - 1) // m * m


def _cdiv(a, b):
    return -(-a // b)


def matvec_kernel(data_ref, coef_ref, out_ref):
    # data_ref: (TM, K) f32, coef_ref: (1, K) f32, out_ref: (1, TM) f32.
    # MXU contraction over K: out[0, m] = sum_k coef[0, k] * data[m, k].
    # Result is (1, TM) -> lane-dense store, no in-kernel relayout.
    out_ref[...] = lax.dot_general(
        coef_ref[...],
        data_ref[...],
        dimension_numbers=(((1,), (1,)), ((), ())),
        preferred_element_type=jnp.float32,
    )


def _plan_tiles(M, K, *, max_tile_m=8192, vmem_budget=12 << 20):
    """Row-tile size + tile count, with lane-padding-aware VMEM accounting."""
    lane_k = _round_up(K, 128)                 # VMEM lane padding of the last dim
    bytes_per_row = lane_k * 4                 # f32
    # Double-buffered input block must fit the budget (output/coef are tiny).
    cap = (vmem_budget // (2 * bytes_per_row)) // 128 * 128
    cap = max(128, cap)
    tile_cap = min(max_tile_m, cap)

    if M <= tile_cap:
        # Single tile covering the whole array: exact extents (no (8,128)
        # constraint when block == full dim), no padding, one HBM pass.
        return M, 1

    ntiles = _cdiv(M, tile_cap)
    if ntiles % 2:
        ntiles += 1                            # even split for v7x 2-TC megacore
    tm = _round_up(_cdiv(M, ntiles), 128)
    tm = min(tm, tile_cap)
    return tm, _cdiv(M, tm)


def dummy_model_forward(data, coefficients, *, max_tile_m=8192):
    """Equivalent of DummyModel.forward: matmul(data, coefficients) -> (M,)."""
    data = jnp.asarray(data, dtype=jnp.float32)
    coef2d = jnp.asarray(coefficients, dtype=jnp.float32).reshape(1, -1)
    M, K = data.shape

    tm, num_tiles = _plan_tiles(M, K, max_tile_m=max_tile_m)

    out_row = pl.pallas_call(
        matvec_kernel,
        out_shape=jax.ShapeDtypeStruct((1, M), jnp.float32),
        grid=(num_tiles,),
        in_specs=[
            # Streamed, double-buffered row tiles; ragged last tile is clipped
            # by Pallas (no jnp.pad copy in HBM).
            pl.BlockSpec((tm, K), lambda i: (i, 0)),
            # Coefficients stay VMEM-resident across the whole grid.
            pl.BlockSpec((1, K), lambda i: (0, 0)),
        ],
        # Lane-dense (1, TM) output row per tile; OOB columns of a ragged last
        # tile are dropped on store.
        out_specs=pl.BlockSpec((1, tm), lambda i: (0, i)),
        compiler_params=pltpu.CompilerParams(
            dimension_semantics=("parallel",),     # megacore row split on v7x
        ),
        cost_estimate=pl.CostEstimate(
            flops=2 * M * K,
            transcendentals=0,
            bytes_accessed=4 * (M * K + M + K),
        ),
    )(data, coef2d)
    return out_row[0]


if __name__ == "__main__":
    key = jax.random.PRNGKey(0)
    coefficients = jnp.array(COEFFICIENTS, dtype=jnp.float32)

    # Mimics load_fMRI_data: np.random.rand(10, 10) -> uniform [0, 1).
    data_small = jax.random.uniform(key, (10, 10), dtype=jnp.float32)
    out_small = jax.block_until_ready(dummy_model_forward(data_small, coefficients))
    ref_small = jnp.matmul(data_small, coefficients)
    assert out_small.shape == (10,)
    assert jnp.allclose(out_small, ref_small, atol=1e-5, rtol=1e-5)

    # Larger run: now a single VMEM-resident tile (one HBM pass, one grid step).
    data_big = jax.random.uniform(jax.random.PRNGKey(1), (2048, 10), dtype=jnp.float32)
    out_big = jax.block_until_ready(dummy_model_forward(data_big, coefficients))
    ref_big = jnp.matmul(data_big, coefficients)
    assert out_big.shape == (2048,)
    assert jnp.allclose(out_big, ref_big, atol=1e-4, rtol=1e-5)

    # Multi-tile + ragged-tail path (forced small tile cap): exercises the
    # even-tile parallel grid and Pallas partial-block clipping, no padding.
    data_rag = jax.random.uniform(jax.random.PRNGKey(2), (1000, 10), dtype=jnp.float32)
    out_rag = jax.block_until_ready(
        dummy_model_forward(data_rag, coefficients, max_tile_m=256))
    ref_rag = jnp.matmul(data_rag, coefficients)
    assert out_rag.shape == (1000,)
    assert jnp.allclose(out_rag, ref_rag, atol=1e-4, rtol=1e-5)

    print("KERNEL_OK")
</pallas_src>

<mosaic_0001>
module attributes {stable_mosaic.version = 11 : i64} {
  func.func @matvec_kernel(%arg0: i32, %arg1: memref<10x10xf32, #tpu.memory_space<vmem>>, %arg2: memref<1x10xf32, #tpu.memory_space<vmem>>, %arg3: memref<1x10xf32, #tpu.memory_space<vmem>>) attributes {dimension_semantics = [#tpu.dimension_semantics<parallel>], iteration_bounds = array<i64: 1>, scalar_prefetch = 0 : i64, scratch_operands = 0 : i64, tpu.core_type = #tpu.core_type<tc>, window_params = [{transform_indices = @transform_0, window_bounds = array<i64: 10, 10>}, {pipeline_mode = #tpu.pipeline_mode<synchronous>, transform_indices = @transform_1, window_bounds = array<i64: 1, 10>}, {transform_indices = @transform_2, window_bounds = array<i64: 1, 10>}]} {
    %c0 = arith.constant 0 : index
    %c0_0 = arith.constant 0 : index
    %0 = vector.load %arg2[%c0, %c0_0] : memref<1x10xf32, #tpu.memory_space<vmem>>, vector<1x10xf32>
    %c0_1 = arith.constant 0 : index
    %c0_2 = arith.constant 0 : index
    %1 = vector.load %arg1[%c0_1, %c0_2] : memref<10x10xf32, #tpu.memory_space<vmem>>, vector<10x10xf32>
    %cst = arith.constant dense<0.000000e+00> : vector<1x10xf32>
    %2 = tpu.matmul %0, %1, %cst {dimension_numbers = #tpu.dot_dimension_numbers<[1], [1], [0], [0], [0, 0, 1, 0], [], []>} : vector<1x10xf32>, vector<10x10xf32>, vector<1x10xf32> -> vector<1x10xf32>
    %c0_3 = arith.constant 0 : index
    %c0_4 = arith.constant 0 : index
    %3 = vector.load %arg3[%c0_3, %c0_4] : memref<1x10xf32, #tpu.memory_space<vmem>>, vector<1x10xf32>
    tpu.vector_store %arg3[%c0_3, %c0_4], %2 {strides = array<i32>} : memref<1x10xf32, #tpu.memory_space<vmem>>, vector<1x10xf32>,
    return
  }
  func.func @transform_0(%arg0: i32) -> (i32, i32) {
    %c0_i32 = arith.constant 0 : i32
    %c0_i32_0 = arith.constant 0 : i32
    return %arg0, %c0_i32 : i32, i32
  }
  func.func @transform_1(%arg0: i32) -> (i32, i32) {
    %c0_i32 = arith.constant 0 : i32
    %c0_i32_0 = arith.constant 0 : i32
    %c0_i32_1 = arith.constant 0 : i32
    return %c0_i32, %c0_i32_0 : i32, i32
  }
  func.func @transform_2(%arg0: i32) -> (i32, i32) {
    %c0_i32 = arith.constant 0 : i32
    %c0_i32_0 = arith.constant 0 : i32
    return %c0_i32, %arg0 : i32, i32
  }
}

</mosaic_0001>

<llo_original>
// kernel: tpu_custom_call.1
$region0: #{tpu_custom_call.1}
  #allocation0 [shape = 'u32[]', space=smem, size = 0x4, offset = 0x4, fixed_abs, tag = 'smem constant byte address 0x4 - core index']
  #allocation1 [shape = 'u32[144,128]{1,0:T(1,128)}', space=vmem, size = 0x12000, scoped, tag = 'internal scratch']
  %s0 = inlined_call_operand.hbm [shape: f32[10,10], index: 0, kind: input, shape index: {}]
  %s1 = inlined_call_operand.vmem [shape: f32[1,10], index: 1, kind: input, shape index: {}]
  %s2 = inlined_call_operand.hbm [shape: f32[1,10], index: 2, kind: output, shape index: {}]
  %s3 = sld [smem:[#allocation0]]
  $region22: #{tpu_custom_call.1} parent=0
    _
  %s5 = ssub.s32 1, %s3
  %s6 = scalar_select 0, %s5, %s3
  $region1: #{tpu_custom_call.1} parent=0
    #allocation2 [shape = 'u8[8192]{0}', space=vmem, size = 0x2000, scoped, tag = 'input window, operand 0, single buffered']
    #allocation3 [shape = 's32[1]{0}', space=sflag, size = 0x4, scoped, tag = 'scoped memory for tpu_custom_call.1']
    #allocation4 [shape = 's32[1]{0}', space=sflag, size = 0x4, scoped, tag = 'scoped memory for tpu_custom_call.1']
    #allocation5 [shape = 'u8[512]{0}', space=vmem, size = 0x400, scoped, tag = 'output window, operand 0, single buffered']
    %7 = vsyncpa [#allocation3], 0
    %8 = vsyncpa [#allocation4], 0
    // Predicated region
    $region2: #{tpu_custom_call.1} parent=1 // pred_check
      _
    $region3: #{tpu_custom_call.1} parent=1 // pred_check_branch
      %10 = sbr.rel (0) target = $region5
    $region4: #{tpu_custom_call.1} parent=1 // pred_region
      %s12 = ssub.s32 256, 256
      %13 = vsyncadd [#allocation3], %s12
      %s14 = sshll.u32 [#allocation2], 4
      %s15 = int_to_ptr.vmem [resolvable:$true] %s14
      %20 = dma.hbm_to_vmem [thread:$0]  %s0, 256, %s15, [#allocation3], 128, 128, 8
    $region5: #{tpu_custom_call.1} parent=1 // pred_fallthru
      _
    // Predicated region
    $region6: #{tpu_custom_call.1} parent=1 // pred_check
      _
    $region7: #{tpu_custom_call.1} parent=1 // pred_check_branch
      %22 = sbr.rel (0) target = $region9
    $region8: #{tpu_custom_call.1} parent=1 // pred_region
      _
    $region9: #{tpu_custom_call.1} parent=1 // pred_fallthru
      _
    // Predicated region
    $region10: #{tpu_custom_call.1} parent=1 // pred_check
      _
    $region11: #{tpu_custom_call.1} parent=1 // pred_check_branch
      %24 = sbr.rel (0) target = $region13
    $region12: #{tpu_custom_call.1} parent=1 // pred_region
      %25 = dma.done [#allocation3], 256
    $region13: #{tpu_custom_call.1} parent=1 // pred_fallthru
      _
    %v26 = vld [vmem:[%s1] sm:$0x1]
    %v27 = vld [vmem:[#allocation2] sm:$0xff]
    %v28 = vld [vmem:[#allocation2 + $0x8] sm:$0x3]
    %vm29 = vcmask 80896
    %v31 = vsel %vm29, %v26, 0
    %v34 = vsel %vm29, %v27, 0
    %v37 = vsel %vm29, %v28, 0
    %39 = vmatprep.subr.mxu0 0.0
    %40 = vmatpush1.xpose.msra.mxu0 %v34
    %41 = vmatprep.subr.mxu0 0.0
    %42 = vmatpush1.xpose.msra.mxu0 %v37
    %43 = vmatprep.subr.mxu0 0.0
    %44 = vmatpush1.xpose.msra.mxu0 0.0
    %45 = vmatprep.subr.mxu0 0.0
    %46 = vmatpush1.xpose.msra.mxu0 0.0
    %47 = vmatprep.subr.mxu0 0.0
    %48 = vmatpush1.xpose.msra.mxu0 0.0
    %49 = vmatprep.subr.mxu0 0.0
    %50 = vmatpush1.xpose.msra.mxu0 0.0
    %51 = vmatprep.subr.mxu0 0.0
    %52 = vmatpush1.xpose.msra.mxu0 0.0
    %53 = vmatprep.subr.mxu0 0.0
    %54 = vmatpush1.xpose.msra.mxu0 0.0
    %55 = vmatprep.subr.mxu0 0.0
    %56 = vmatpush1.xpose.msra.mxu0 0.0
    %57 = vmatprep.subr.mxu0 0.0
    %58 = vmatpush1.xpose.msra.mxu0 0.0
    %59 = vmatprep.subr.mxu0 0.0
    %60 = vmatpush1.xpose.msra.mxu0 0.0
    %61 = vmatprep.subr.mxu0 0.0
    %62 = vmatpush1.xpose.msra.mxu0 0.0
    %63 = vmatprep.subr.mxu0 0.0
    %64 = vmatpush1.xpose.msra.mxu0 0.0
    %65 = vmatprep.subr.mxu0 0.0
    %66 = vmatpush1.xpose.msra.mxu0 0.0
    %67 = vmatprep.subr.mxu0 0.0
    %68 = vmatpush1.xpose.msra.mxu0 0.0
    %69 = vmatprep.subr.mxu0 0.0
    %70 = vmatpush1.xpose.msra.mxu0 0.0
    %71 = vmatprep.subr.mxu0 0.0
    %72 = vmatpush1.xpose.msra.mxu0 0.0
    %73 = vmatprep.subr.mxu0 0.0
    %74 = vmatpush1.xpose.msra.mxu0 0.0
    %75 = vmatprep.subr.mxu0 0.0
    %76 = vmatpush1.xpose.msra.mxu0 0.0
    %77 = vmatprep.subr.mxu0 0.0
    %78 = vmatpush1.xpose.msra.mxu0 0.0
    %79 = vmatprep.subr.mxu0 0.0
    %80 = vmatpush1.xpose.msra.mxu0 0.0
    %81 = vmatprep.subr.mxu0 0.0
    %82 = vmatpush1.xpose.msra.mxu0 0.0
    %83 = vmatprep.subr.mxu0 0.0
    %84 = vmatpush1.xpose.msra.mxu0 0.0
    %85 = vmatprep.subr.mxu0 0.0
    %86 = vmatpush1.xpose.msra.mxu0 0.0
    %87 = vmatprep.subr.mxu0 0.0
    %88 = vmatpush1.xpose.msra.mxu0 0.0
    %89 = vmatprep.subr.mxu0 0.0
    %90 = vmatpush1.xpose.msra.mxu0 0.0
    %91 = vmatprep.subr.mxu0 0.0
    %92 = vmatpush1.xpose.msra.mxu0 0.0
    %93 = vmatprep.subr.mxu0 0.0
    %94 = vmatpush1.xpose.msra.mxu0 0.0
    %95 = vmatprep.subr.mxu0 0.0
    %96 = vmatpush1.xpose.msra.mxu0 0.0
    %97 = vmatprep.subr.mxu0 0.0
    %98 = vmatpush1.xpose.msra.mxu0 0.0
    %99 = vmatprep.subr.mxu0 0.0
    %100 = vmatpush1.xpose.msra.mxu0 0.0
    %101 = vmatprep.subr.mxu0 0.0
    %102 = vmatpush1.xpose.msra.mxu0 0.0
    %103 = vmatprep.mubr.f32.mxu0 0.0
    %104 = vmatmul.mubr.f32.gmra.mrb[0].mxu0 %v31
    %v105 = vpop.f32.mrb[0].mxu0
    %v106 = vadd.f32 0.0, %v105
    %v107 = vpop.f32.mrb[0].mxu0
    %108 = vdwg.mxu0
    %vm109 = vcmask 73728
    %110 = vst.msk [vmem:[#allocation5] sm:$0x1] %vm109, %v106
    // Predicated region
    $region14: #{tpu_custom_call.1} parent=1 // pred_check
      _
    $region15: #{tpu_custom_call.1} parent=1 // pred_check_branch
      %112 = sbr.rel (0) target = $region17
    $region16: #{tpu_custom_call.1} parent=1 // pred_region
      %s114 = ssub.s32 16, 16
      %115 = vsyncadd [#allocation4], %s114
      %s117 = sshll.u32 [#allocation5], 4
      %s118 = int_to_ptr.vmem [resolvable:$true] %s117
      %120 = dma.vmem_to_hbm [thread:$0]  %s118, 16, %s2, [#allocation4]
    $region17: #{tpu_custom_call.1} parent=1 // pred_fallthru
      _
    // Predicated region
    $region18: #{tpu_custom_call.1} parent=1 // pred_check
      _
    $region19: #{tpu_custom_call.1} parent=1 // pred_check_branch
      %122 = sbr.rel (0) target = $region21
    $region20: #{tpu_custom_call.1} parent=1 // pred_region
      %123 = dma.done [#allocation4], 16
    $region21: #{tpu_custom_call.1} parent=1 // pred_fallthru
      _
    %124 = vsyncpa [#allocation3], 1
    %125 = vsyncpa [#allocation4], 1

</llo_original>
